<compile_context>
chip_gen: v7x
topology: tpu7x:2x2x1
jax: 0.10.0
libtpu: 0.0.40
codegen_flags: <defaults>
</compile_context>

<pallas_src>
import functools

import jax
import jax.numpy as jnp
from jax.experimental import pallas as pl
from jax.experimental.pallas import tpu as pltpu


LANE = 128
_SINGLE_BLOCK_MAX = 1024                # padded node count for the no-grid path
_Y_RESIDENT_BYTES = 4 * 1024 * 1024     # keep resident Y under ~4 MiB (x2 buffers)


def _round_up(x, m):
    return pl.cdiv(x, m) * m


def _choose_tiling(n0):
    """n0 is the node count already padded to a multiple of 128."""
    if n0 <= _SINGLE_BLOCK_MAX:
        return n0, n0, n0
    n_pad = _round_up(n0, 512)
    tm = 512                                   # keeps row-grid >= 2 (v7x 2 TCs)
    tk = 1024 if n_pad % 1024 == 0 else 512    # >= 256-512 KiB adj DMA per step
    return n_pad, tm, tk


# ----------------------------- Pallas kernels ------------------------------ #
def _gcn_single_kernel(adj_ref, y_ref, dis_ref, b_ref, o_ref):
    """One-block path (small graphs): everything fits in VMEM, no grid."""
    agg = jnp.dot(adj_ref[...].astype(y_ref.dtype), y_ref[...],
                  preferred_element_type=jnp.float32)
    o_ref[...] = agg * dis_ref[...] + b_ref[...]


def _gcn_tiled_kernel(adj_ref, y_ref, dis_ref, b_ref, o_ref, *, tk, y_resident):
    # adj_ref: [TM, TK]       int8   (A + I) edge counts (dominant HBM stream)
    # y_ref  : [N_pad, Cp] or [TK, Cp]  bf16  D^{-1/2} X W^T (resident / streamed)
    # dis_ref: [TM, 1]        f32    D^{-1/2} row scale
    # b_ref  : [1, Cp]        f32    bias
    # o_ref  : [TM, Cp]       f32    resident output block (accumulator)
    k = pl.program_id(1)

    @pl.when(k == 0)
    def _():
        o_ref[...] = jnp.zeros_like(o_ref)

    if y_resident:
        start = pl.multiple_of(k * tk, tk)
        y_blk = y_ref[pl.ds(start, tk), :]
    else:
        y_blk = y_ref[...]

    # int8 -> bf16 cast is exact for small counts and feeds the MXU on all
    # generations (v7x has no integer MXU path); accumulate in f32.
    o_ref[...] += jnp.dot(adj_ref[...].astype(y_blk.dtype), y_blk,
                          preferred_element_type=jnp.float32)

    @pl.when(k == pl.num_programs(1) - 1)
    def _():
        # Left normalization D^{-1/2} (f32) + bias, once per row tile.
        o_ref[...] = o_ref[...] * dis_ref[...] + b_ref[...]


# ------------------------------ forward pass ------------------------------- #
def linear_encoder_forward(x, edge_index, w_t, bias,
                           matmul_dtype=jnp.bfloat16, adj_dtype=jnp.int8):
    """x: [N, Cin] f32, edge_index: [2, E] int, w_t: [Cin, Cout], bias: [Cout]."""
    n, _ = x.shape
    c_out = w_t.shape[1]
    n0 = _round_up(n, LANE)
    n_pad, tm, tk = _choose_tiling(n0)
    cout_pad = _round_up(c_out, LANE)

    # ---- graph glue in plain JAX (data-dependent scatter; f32 norm) ------- #
    src = edge_index[0].astype(jnp.int32)
    dst = edge_index[1].astype(jnp.int32)
    loop = jnp.arange(n, dtype=jnp.int32)
    src = jnp.concatenate([src, loop])
    dst = jnp.concatenate([dst, loop])
    deg = jnp.zeros((n,), jnp.float32).at[dst].add(1.0)
    dis = jnp.where(deg > 0, jax.lax.rsqrt(deg), 0.0)          # D^{-1/2}, f32

    # (A + I) counts scattered ONCE straight into the padded int8 buffer the
    # kernel reads; zero padding keeps the math exact.  (int8 assumes < 128
    # duplicate edges per (dst, src) pair.)
    adj = jnp.zeros((n_pad, n_pad), adj_dtype).at[dst, src].add(
        jnp.ones(src.shape[0], adj_dtype))

    # Tiny projection and right-normalization, kept in f32 and done by XLA;
    # only the result feeds the big Pallas contraction.
    y = dis[:, None] * (x.astype(jnp.float32) @ w_t.astype(jnp.float32))
    y_p = jnp.zeros((n_pad, cout_pad), matmul_dtype).at[:n, :c_out].set(
        y.astype(matmul_dtype))
    dis_p = jnp.zeros((n_pad, 1), jnp.float32).at[:n, 0].set(dis)
    b_p = jnp.zeros((1, cout_pad), jnp.float32).at[0, :c_out].set(
        bias.reshape(-1).astype(jnp.float32))

    out_shape = jax.ShapeDtypeStruct((n_pad, cout_pad), jnp.float32)

    # ---- small-graph path: single block, no grid machinery ---------------- #
    if n_pad <= _SINGLE_BLOCK_MAX:
        out = pl.pallas_call(_gcn_single_kernel, out_shape=out_shape)(
            adj, y_p, dis_p, b_p)
        return out[:n, :c_out]

    # ---- tiled, memory-bound path ------------------------------------------ #
    y_resident = (n_pad * cout_pad * jnp.dtype(matmul_dtype).itemsize
                  <= _Y_RESIDENT_BYTES)
    if y_resident:
        y_spec = pl.BlockSpec((n_pad, cout_pad), lambda i, k: (0, 0))
    else:
        y_spec = pl.BlockSpec((tk, cout_pad), lambda i, k: (k, 0))

    grid = (n_pad // tm, n_pad // tk)
    bytes_accessed = (n_pad * n_pad * jnp.dtype(adj_dtype).itemsize        # adj
                      + n_pad * cout_pad * jnp.dtype(matmul_dtype).itemsize  # Y
                      + n_pad * cout_pad * 4                               # out
                      + n_pad * 4 + cout_pad * 4)
    flops = 2 * n_pad * n_pad * cout_pad

    kernel = functools.partial(_gcn_tiled_kernel, tk=tk, y_resident=y_resident)
    out = pl.pallas_call(
        kernel,
        out_shape=out_shape,
        grid_spec=pltpu.PrefetchScalarGridSpec(
            num_scalar_prefetch=0,
            grid=grid,
            in_specs=[
                pl.BlockSpec((tm, tk), lambda i, k: (i, k)),        # adj (int8)
                y_spec,                                             # Y (bf16)
                pl.BlockSpec((tm, 1), lambda i, k: (i, 0)),         # D^{-1/2} rows
                pl.BlockSpec((1, cout_pad), lambda i, k: (0, 0)),   # bias
            ],
            out_specs=pl.BlockSpec((tm, cout_pad), lambda i, k: (i, 0)),
        ),
        compiler_params=pltpu.CompilerParams(
            dimension_semantics=("parallel", "arbitrary"),
        ),
        cost_estimate=pl.CostEstimate(
            flops=flops, transcendentals=0, bytes_accessed=int(bytes_accessed)),
    )(adj, y_p, dis_p, b_p)
    return out[:n, :c_out]


# ------------------------------- module ------------------------------------ #
class LinearEncoderPallas:
    """JAX/Pallas equivalent of LinearEncoder(in_channels, out_channels)."""

    def __init__(self, in_channels, out_channels, key):
        # GCNConv's internal Linear uses Glorot init, bias initialized to zero.
        limit = jnp.sqrt(6.0 / (in_channels + out_channels))
        w = jax.random.uniform(key, (out_channels, in_channels), jnp.float32,
                               -limit, limit)
        self.w_t = jnp.transpose(w)                      # [C_in, C_out]
        self.bias = jnp.zeros((out_channels,), jnp.float32)
        self._fwd = jax.jit(linear_encoder_forward)

    def __call__(self, x, edge_index):
        return self._fwd(x, edge_index, self.w_t, self.bias)


# ------------------------------ reference ---------------------------------- #
def gcn_reference(x, edge_index, w_t, bias):
    """Pure-f32 dense GCNConv reference (PyG gcn_norm defaults)."""
    n = x.shape[0]
    src = edge_index[0].astype(jnp.int32)
    dst = edge_index[1].astype(jnp.int32)
    loop = jnp.arange(n, dtype=jnp.int32)
    src = jnp.concatenate([src, loop])
    dst = jnp.concatenate([dst, loop])
    deg = jnp.zeros((n,), jnp.float32).at[dst].add(1.0)
    dis = jax.lax.rsqrt(deg)
    norm = dis[src] * dis[dst]
    adj = jnp.zeros((n, n), jnp.float32).at[dst, src].add(norm)
    return adj @ (x @ w_t) + bias[None, :]


def _ring_edges(n):
    s = jnp.arange(n, dtype=jnp.int32)
    d = (s + 1) % n
    return jnp.stack([jnp.concatenate([s, d]), jnp.concatenate([d, s])], axis=0)


# --------------------------------- demo ------------------------------------- #
if __name__ == "__main__":
    key = jax.random.PRNGKey(0)
    k_x, k_w, k_x2 = jax.random.split(key, 3)

    C_IN, C_OUT = 8, 32
    encoder = LinearEncoderPallas(C_IN, C_OUT, k_w)

    # 1) demo-scale graph (skeleton joints as nodes) -> single-block path.
    N = 16
    x = jax.random.normal(k_x, (N, C_IN), jnp.float32)
    edge_index = _ring_edges(N)                                    # [2, 32]
    out = jax.block_until_ready(encoder(x, edge_index))
    ref = gcn_reference(x, edge_index, encoder.w_t, encoder.bias)
    assert out.shape == (N, C_OUT)
    assert jnp.allclose(out, ref, atol=2e-2, rtol=2e-2), (
        float(jnp.max(jnp.abs(out - ref))))

    # 2) larger graph -> exercises the tiled, K-accumulating kernel path.
    N2 = 2048
    x2 = jax.random.normal(k_x2, (N2, C_IN), jnp.float32)
    edge_index2 = _ring_edges(N2)
    out2 = jax.block_until_ready(encoder(x2, edge_index2))
    ref2 = gcn_reference(x2, edge_index2, encoder.w_t, encoder.bias)
    assert out2.shape == (N2, C_OUT)
    assert jnp.allclose(out2, ref2, atol=2e-2, rtol=2e-2), (
        float(jnp.max(jnp.abs(out2 - ref2))))

    print("KERNEL_OK")
</pallas_src>

<mosaic_0001>
module attributes {stable_mosaic.version = 11 : i64} {
  func.func private @main(%arg0: i32) attributes {dimension_semantics = [#tpu.dimension_semantics<core_parallel>], iteration_bounds = array<i64: 2>, tpu.core_type = #tpu.core_type<sc_scalar_subcore>, window_params = []} {
    return
  }
}

module attributes {stable_mosaic.version = 11 : i64} {
  func.func private @main(%arg0: i32) attributes {dimension_semantics = [#tpu.dimension_semantics<core_parallel>], iteration_bounds = array<i64: 2>, tpu.core_type = #tpu.core_type<sc_scalar_subcore>, window_params = []} {
    return
  }
}

module attributes {stable_mosaic.version = 11 : i64} {
  func.func @_gcn_single_kernel(%arg0: memref<128x128xi8, #tpu.memory_space<vmem>>, %arg1: memref<128x128xbf16, #tpu.memory_space<vmem>>, %arg2: memref<128x1xf32, #tpu.memory_space<vmem>>, %arg3: memref<1x128xf32, #tpu.memory_space<vmem>>, %arg4: memref<128x128xf32, #tpu.memory_space<vmem>>) attributes {dimension_semantics = [], scalar_prefetch = 0 : i64, scratch_operands = 0 : i64, tpu.core_type = #tpu.core_type<tc>} {
    %c0 = arith.constant 0 : index
    %c0_0 = arith.constant 0 : index
    %0 = vector.load %arg0[%c0, %c0_0] : memref<128x128xi8, #tpu.memory_space<vmem>>, vector<128x128xi8>
    %1 = arith.sitofp %0 : vector<128x128xi8> to vector<128x128xbf16>
    %c0_1 = arith.constant 0 : index
    %c0_2 = arith.constant 0 : index
    %2 = vector.load %arg1[%c0_1, %c0_2] : memref<128x128xbf16, #tpu.memory_space<vmem>>, vector<128x128xbf16>
    %cst = arith.constant dense<0.000000e+00> : vector<128x128xf32>
    %3 = tpu.matmul %1, %2, %cst {dimension_numbers = #tpu.dot_dimension_numbers<[1], [0], [0], [1], [0, 0, 1, 1], [], []>} : vector<128x128xbf16>, vector<128x128xbf16>, vector<128x128xf32> -> vector<128x128xf32>
    %c0_3 = arith.constant 0 : index
    %c0_4 = arith.constant 0 : index
    %4 = vector.load %arg2[%c0_3, %c0_4] : memref<128x1xf32, #tpu.memory_space<vmem>>, vector<128x1xf32>
    %5 = vector.broadcast %4 : vector<128x1xf32> to vector<128x128xf32>
    %6 = arith.mulf %3, %5 : vector<128x128xf32>
    %c0_5 = arith.constant 0 : index
    %c0_6 = arith.constant 0 : index
    %7 = vector.load %arg3[%c0_5, %c0_6] : memref<1x128xf32, #tpu.memory_space<vmem>>, vector<1x128xf32>
    %8 = vector.broadcast %7 : vector<1x128xf32> to vector<128x128xf32>
    %9 = arith.addf %6, %8 : vector<128x128xf32>
    %c0_7 = arith.constant 0 : index
    %c0_8 = arith.constant 0 : index
    %10 = vector.load %arg4[%c0_7, %c0_8] : memref<128x128xf32, #tpu.memory_space<vmem>>, vector<128x128xf32>
    tpu.vector_store %arg4[%c0_7, %c0_8], %9 {strides = array<i32>} : memref<128x128xf32, #tpu.memory_space<vmem>>, vector<128x128xf32>,
    return
  }
}

</mosaic_0001>

<llo_original>
// kernel: linear_encoder_forward.1
$region0: #{linear_encoder_forward.1}
  #allocation0 [shape = 'u32[]', space=smem, size = 0x4, offset = 0x4, fixed_abs, tag = 'smem constant byte address 0x4 - core index']
  #allocation1 [shape = 'u32[144,128]{1,0:T(1,128)}', space=vmem, size = 0x12000, scoped, tag = 'internal scratch']
  %s0 = inlined_call_operand.vmem [shape: s8[128,128], index: 0, kind: input, shape index: {}]
  %s1 = inlined_call_operand.vmem [shape: bf16[128,128], index: 1, kind: input, shape index: {}]
  %s2 = inlined_call_operand.vmem [shape: f32[128,1], index: 2, kind: input, shape index: {}]
  %s3 = inlined_call_operand.vmem [shape: f32[1,128], index: 3, kind: input, shape index: {}]
  %s4 = inlined_call_operand.vmem [shape: f32[128,128], index: 4, kind: output, shape index: {}]
  %s5 = sld [smem:[#allocation0]]
  $region26: #{linear_encoder_forward.1} parent=0
    _
  %s7 = ssub.s32 1, %s5
  %s8 = scalar_select 0, %s7, %s5
  // Predicated region
  $region2: #{linear_encoder_forward.1} parent=0 // pred_check
    _
  $region3: #{linear_encoder_forward.1} parent=0 // pred_check_branch
    %10 = sbr.rel (0) target = $region5
  $region4: #{linear_encoder_forward.1} parent=0 // pred_region
    _
  $region5: #{linear_encoder_forward.1} parent=0 // pred_fallthru
    _
  // Predicated region
  $region6: #{linear_encoder_forward.1} parent=0 // pred_check
    _
  $region7: #{linear_encoder_forward.1} parent=0 // pred_check_branch
    %12 = sbr.rel (0) target = $region9
  $region8: #{linear_encoder_forward.1} parent=0 // pred_region
    _
  $region9: #{linear_encoder_forward.1} parent=0 // pred_fallthru
    _
  // Predicated region
  $region10: #{linear_encoder_forward.1} parent=0 // pred_check
    _
  $region11: #{linear_encoder_forward.1} parent=0 // pred_check_branch
    %14 = sbr.rel (0) target = $region13
  $region12: #{linear_encoder_forward.1} parent=0 // pred_region
    _
  $region13: #{linear_encoder_forward.1} parent=0 // pred_fallthru
    _
  // Predicated region
  $region14: #{linear_encoder_forward.1} parent=0 // pred_check
    _
  $region15: #{linear_encoder_forward.1} parent=0 // pred_check_branch
    %16 = sbr.rel (0) target = $region17
  $region16: #{linear_encoder_forward.1} parent=0 // pred_region
    _
  $region17: #{linear_encoder_forward.1} parent=0 // pred_fallthru
    _
  %v18 = vld [vmem:[%s0] sm:$0x3]
  %v19 = vld [vmem:[%s0 + $0x2] sm:$0x3]
  %v20 = vld [vmem:[%s0 + $0x4] sm:$0x3]
  %v21 = vld [vmem:[%s0 + $0x6] sm:$0x3]
  %v22 = vld [vmem:[%s0 + $0x8] sm:$0x3]
  %v23 = vld [vmem:[%s0 + $0xa] sm:$0x3]
  %v24 = vld [vmem:[%s0 + $0xc] sm:$0x3]
  %v25 = vld [vmem:[%s0 + $0xe] sm:$0x3]
  %v26 = vld [vmem:[%s0 + $0x10] sm:$0x3]
  %v27 = vld [vmem:[%s0 + $0x12] sm:$0x3]
  %v28 = vld [vmem:[%s0 + $0x14] sm:$0x3]
  %v29 = vld [vmem:[%s0 + $0x16] sm:$0x3]
  %v30 = vld [vmem:[%s0 + $0x18] sm:$0x3]
  %v31 = vld [vmem:[%s0 + $0x1a] sm:$0x3]
  %v32 = vld [vmem:[%s0 + $0x1c] sm:$0x3]
  %v33 = vld [vmem:[%s0 + $0x1e] sm:$0x3]
  %v34 = vunpack.c.l.s8.bf16 %v18
  %v35 = vunpack.c.l.s8.bf16 %v19
  %v36 = vunpack.c.l.s8.bf16 %v20
  %v37 = vunpack.c.l.s8.bf16 %v21
  %v38 = vunpack.c.l.s8.bf16 %v22
  %v39 = vunpack.c.l.s8.bf16 %v23
  %v40 = vunpack.c.l.s8.bf16 %v24
  %v41 = vunpack.c.l.s8.bf16 %v25
  %v42 = vunpack.c.l.s8.bf16 %v26
  %v43 = vunpack.c.l.s8.bf16 %v27
  %v44 = vunpack.c.l.s8.bf16 %v28
  %v45 = vunpack.c.l.s8.bf16 %v29
  %v46 = vunpack.c.l.s8.bf16 %v30
  %v47 = vunpack.c.l.s8.bf16 %v31
  %v48 = vunpack.c.l.s8.bf16 %v32
  %v49 = vunpack.c.l.s8.bf16 %v33
  %v50 = vld [vmem:[%s1] sm:$0xf]
  %v51 = vld [vmem:[%s1 + $0x4] sm:$0xf]
  %v52 = vld [vmem:[%s1 + $0x8] sm:$0xf]
  %v53 = vld [vmem:[%s1 + $0xc] sm:$0xf]
  %v54 = vld [vmem:[%s1 + $0x10] sm:$0xf]
  %v55 = vld [vmem:[%s1 + $0x14] sm:$0xf]
  %v56 = vld [vmem:[%s1 + $0x18] sm:$0xf]
  %v57 = vld [vmem:[%s1 + $0x1c] sm:$0xf]
  %v58 = vld [vmem:[%s1 + $0x20] sm:$0xf]
  %v59 = vld [vmem:[%s1 + $0x24] sm:$0xf]
  %v60 = vld [vmem:[%s1 + $0x28] sm:$0xf]
  %v61 = vld [vmem:[%s1 + $0x2c] sm:$0xf]
  %v62 = vld [vmem:[%s1 + $0x30] sm:$0xf]
  %v63 = vld [vmem:[%s1 + $0x34] sm:$0xf]
  %v64 = vld [vmem:[%s1 + $0x38] sm:$0xf]
  %v65 = vld [vmem:[%s1 + $0x3c] sm:$0xf]
  %v82 = vunpack.c.l.b16 %v34
  %v83 = vunpack.c.l.b16 %v35
  %v84 = vunpack.c.l.b16 %v36
  %v85 = vunpack.c.l.b16 %v37
  %v86 = vunpack.c.l.b16 %v38
  %v87 = vunpack.c.l.b16 %v39
  %v88 = vunpack.c.l.b16 %v40
  %v89 = vunpack.c.l.b16 %v41
  %v90 = vunpack.c.l.b16 %v42
  %v91 = vunpack.c.l.b16 %v43
  %v92 = vunpack.c.l.b16 %v44
  %v93 = vunpack.c.l.b16 %v45
  %v94 = vunpack.c.l.b16 %v46
  %v95 = vunpack.c.l.b16 %v47
  %v96 = vunpack.c.l.b16 %v48
  %v97 = vunpack.c.l.b16 %v49
  %v98 = vpack.c.b16 %v83, %v82
  %v99 = vpack.c.b16 %v85, %v84
  %v100 = vpack.c.b16 %v87, %v86
  %v101 = vpack.c.b16 %v89, %v88
  %v102 = vpack.c.b16 %v91, %v90
  %v103 = vpack.c.b16 %v93, %v92
  %v104 = vpack.c.b16 %v95, %v94
  %v105 = vpack.c.b16 %v97, %v96
  %v130 = vunpack.c.l.b16 %v50
  %v131 = vunpack.c.l.b16 %v51
  %v132 = vunpack.c.l.b16 %v52
  %v133 = vunpack.c.l.b16 %v53
  %v134 = vunpack.c.l.b16 %v54
  %v135 = vunpack.c.l.b16 %v55
  %v136 = vunpack.c.l.b16 %v56
  %v137 = vunpack.c.l.b16 %v57
  %v138 = vunpack.c.l.b16 %v58
  %v139 = vunpack.c.l.b16 %v59
  %v140 = vunpack.c.l.b16 %v60
  %v141 = vunpack.c.l.b16 %v61
  %v142 = vunpack.c.l.b16 %v62
  %v143 = vunpack.c.l.b16 %v63
  %v144 = vunpack.c.l.b16 %v64
  %v145 = vunpack.c.l.b16 %v65
  %v146 = vpack.c.b16 %v131, %v130
  %v147 = vpack.c.b16 %v133, %v132
  %v148 = vpack.c.b16 %v135, %v134
  %v149 = vpack.c.b16 %v137, %v136
  %v150 = vpack.c.b16 %v139, %v138
  %v151 = vpack.c.b16 %v141, %v140
  %v152 = vpack.c.b16 %v143, %v142
  %v153 = vpack.c.b16 %v145, %v144
  %162 = vmatprep.subr.bf16.mxu0 0
  %163 = vmatpush1.bf16.msra.mxu0 %v146
  %164 = vmatprep.subr.bf16.mxu0 0
  %165 = vmatpush1.bf16.msra.mxu0 %v147
  %166 = vmatprep.subr.bf16.mxu0 0
  %167 = vmatpush1.bf16.msra.mxu0 %v148
  %168 = vmatprep.subr.bf16.mxu0 0
  %169 = vmatpush1.bf16.msra.mxu0 %v149
  %170 = vmatprep.subr.bf16.mxu0 0
  %171 = vmatpush1.bf16.msra.mxu0 %v150
  %172 = vmatprep.subr.bf16.mxu0 0
  %173 = vmatpush1.bf16.msra.mxu0 %v151
  %174 = vmatprep.subr.bf16.mxu0 0
  %175 = vmatpush1.bf16.msra.mxu0 %v152
  %176 = vmatprep.subr.bf16.mxu0 0
  %177 = vmatpush1.bf16.msra.mxu0 %v153
  %178 = vmatprep.subr.bf16.mxu0 0
  %179 = vmatpush1.bf16.msra.mxu0 0
  %180 = vmatprep.subr.bf16.mxu0 0
  %181 = vmatpush1.bf16.msra.mxu0 0
  %182 = vmatprep.subr.bf16.mxu0 0
  %183 = vmatpush1.bf16.msra.mxu0 0
  %184 = vmatprep.subr.bf16.mxu0 0
  %185 = vmatpush1.bf16.msra.mxu0 0
  %186 = vmatprep.subr.bf16.mxu0 0
  %187 = vmatpush1.bf16.msra.mxu0 0
  %188 = vmatprep.subr.bf16.mxu0 0
  %189 = vmatpush1.bf16.msra.mxu0 0
  %190 = vmatprep.subr.bf16.mxu0 0
  %191 = vmatpush1.bf16.msra.mxu0 0
  %192 = vmatprep.subr.bf16.mxu0 0
  %193 = vmatpush1.bf16.msra.mxu0 0
  %194 = vmatprep.mubr.bf16.mxu0 0
  %195 = vmatmul.mubr.bf16.gmra.mrb[0].mxu0 %v98
  %v196 = vpop.f32.mrb[0].mxu0
  %v197 = vadd.f32 0.0, %v196
  %v198 = vpop.f32.mrb[0].mxu0
  %v199 = vpop.f32.mrb[0].mxu0
  %v200 = vadd.f32 0.0, %v199
  %v201 = vpop.f32.mrb[0].mxu0
  %202 = vmatprep.mubr.bf16.mxu0 0
  %203 = vmatmul.mubr.bf16.gmra.mrb[0].mxu0 %v99
  %v204 = vpop.f32.mrb[0].mxu0
  %v205 = vadd.f32 0.0, %v204
  %v206 = vpop.f32.mrb[0].mxu0
  %v207 = vpop.f32.mrb[0].mxu0
  %v208 = vadd.f32 0.0, %v207
  %v209 = vpop.f32.mrb[0].mxu0
  %210 = vmatprep.mubr.bf16.mxu0 0
  %211 = vmatmul.mubr.bf16.gmra.mrb[0].mxu0 %v100
  %v212 = vpop.f32.mrb[0].mxu0
  %v213 = vadd.f32 0.0, %v212
  %v214 = vpop.f32.mrb[0].mxu0
  %v215 = vpop.f32.mrb[0].mxu0
  %v216 = vadd.f32 0.0, %v215
  %v217 = vpop.f32.mrb[0].mxu0
  %218 = vmatprep.mubr.bf16.mxu0 0
  %219 = vmatmul.mubr.bf16.gmra.mrb[0].mxu0 %v101
  %v220 = vpop.f32.mrb[0].mxu0
  %v221 = vadd.f32 0.0, %v220
  %v222 = vpop.f32.mrb[0].mxu0
  %v223 = vpop.f32.mrb[0].mxu0
  %v224 = vadd.f32 0.0, %v223
  %v225 = vpop.f32.mrb[0].mxu0
  %226 = vmatprep.mubr.bf16.mxu0 0
  %227 = vmatmul.mubr.bf16.gmra.mrb[0].mxu0 %v102
  %v228 = vpop.f32.mrb[0].mxu0
  %v229 = vadd.f32 0.0, %v228
  %v230 = vpop.f32.mrb[0].mxu0
  %v231 = vpop.f32.mrb[0].mxu0
  %v232 = vadd.f32 0.0, %v231
  %v233 = vpop.f32.mrb[0].mxu0
  %234 = vmatprep.mubr.bf16.mxu0 0
  %235 = vmatmul.mubr.bf16.gmra.mrb[0].mxu0 %v103
  %v236 = vpop.f32.mrb[0].mxu0
  %v237 = vadd.f32 0.0, %v236
  %v238 = vpop.f32.mrb[0].mxu0
  %v239 = vpop.f32.mrb[0].mxu0
  %v240 = vadd.f32 0.0, %v239
  %v241 = vpop.f32.mrb[0].mxu0
  %242 = vmatprep.mubr.bf16.mxu0 0
  %243 = vmatmul.mubr.bf16.gmra.mrb[0].mxu0 %v104
  %v244 = vpop.f32.mrb[0].mxu0
  %v245 = vadd.f32 0.0, %v244
  %v246 = vpop.f32.mrb[0].mxu0
  %v247 = vpop.f32.mrb[0].mxu0
  %v248 = vadd.f32 0.0, %v247
  %v249 = vpop.f32.mrb[0].mxu0
  %250 = vmatprep.mubr.bf16.mxu0 0
  %251 = vmatmul.mubr.bf16.gmra.mrb[0].mxu0 %v105
  %v252 = vpop.f32.mrb[0].mxu0
  %v253 = vadd.f32 0.0, %v252
  %v254 = vpop.f32.mrb[0].mxu0
  %v255 = vpop.f32.mrb[0].mxu0
  %v256 = vadd.f32 0.0, %v255
  %v257 = vpop.f32.mrb[0].mxu0
  %258 = vdwg.mxu0
  %v259 = vld [vmem:[%s2] sm:$0xff]
  %v260 = vld [vmem:[%s2 + $0x8] sm:$0xff]
  %v261 = vld [vmem:[%s2 + $0x10] sm:$0xff]
  %v262 = vld [vmem:[%s2 + $0x18] sm:$0xff]
  %v263 = vld [vmem:[%s2 + $0x20] sm:$0xff]
  %v264 = vld [vmem:[%s2 + $0x28] sm:$0xff]
  %v265 = vld [vmem:[%s2 + $0x30] sm:$0xff]
  %v266 = vld [vmem:[%s2 + $0x38] sm:$0xff]
  %v267 = vld [vmem:[%s2 + $0x40] sm:$0xff]
  %v268 = vld [vmem:[%s2 + $0x48] sm:$0xff]
  %v269 = vld [vmem:[%s2 + $0x50] sm:$0xff]
  %v270 = vld [vmem:[%s2 + $0x58] sm:$0xff]
  %v271 = vld [vmem:[%s2 + $0x60] sm:$0xff]
  %v272 = vld [vmem:[%s2 + $0x68] sm:$0xff]
  %v273 = vld [vmem:[%s2 + $0x70] sm:$0xff]
  %v274 = vld [vmem:[%s2 + $0x78] sm:$0xff]
  %276 = vset.pattern.permute.xlu0 0
  %277 = vperm.xlu0 %276, %v259
  %v278 = vpop.permute.xlu0 %277
  %281 = vset.pattern.permute.xlu0 0
  %282 = vperm.xlu0 %281, %v260
  %v283 = vpop.permute.xlu0 %282
  %286 = vset.pattern.permute.xlu0 0
  %287 = vperm.xlu0 %286, %v261
  %v288 = vpop.permute.xlu0 %287
  %291 = vset.pattern.permute.xlu0 0
  %292 = vperm.xlu0 %291, %v262
  %v293 = vpop.permute.xlu0 %292
  %296 = vset.pattern.permute.xlu0 0
  %297 = vperm.xlu0 %296, %v263
  %v298 = vpop.permute.xlu0 %297
  %301 = vset.pattern.permute.xlu0 0
  %302 = vperm.xlu0 %301, %v264
  %v303 = vpop.permute.xlu0 %302
  %306 = vset.pattern.permute.xlu0 0
  %307 = vperm.xlu0 %306, %v265
  %v308 = vpop.permute.xlu0 %307
  %311 = vset.pattern.permute.xlu0 0
  %312 = vperm.xlu0 %311, %v266
  %v313 = vpop.permute.xlu0 %312
  %316 = vset.pattern.permute.xlu0 0
  %317 = vperm.xlu0 %316, %v267
  %v318 = vpop.permute.xlu0 %317
  %321 = vset.pattern.permute.xlu0 0
  %322 = vperm.xlu0 %321, %v268
  %v323 = vpop.permute.xlu0 %322
  %326 = vset.pattern.permute.xlu0 0
  %327 = vperm.xlu0 %326, %v269
  %v328 = vpop.permute.xlu0 %327
  %331 = vset.pattern.permute.xlu0 0
  %332 = vperm.xlu0 %331, %v270
  %v333 = vpop.permute.xlu0 %332
  %336 = vset.pattern.permute.xlu0 0
  %337 = vperm.xlu0 %336, %v271
  %v338 = vpop.permute.xlu0 %337
  %341 = vset.pattern.permute.xlu0 0
  %342 = vperm.xlu0 %341, %v272
  %v343 = vpop.permute.xlu0 %342
  %346 = vset.pattern.permute.xlu0 0
  %347 = vperm.xlu0 %346, %v273
  %v348 = vpop.permute.xlu0 %347
  %351 = vset.pattern.permute.xlu0 0
  %352 = vperm.xlu0 %351, %v274
  %v353 = vpop.permute.xlu0 %352
  %v355 = vmul.f32 %v197, %v278
  %v356 = vmul.f32 %v200, %v283
  %v357 = vmul.f32 %v205, %v288
  %v358 = vmul.f32 %v208, %v293
  %v359 = vmul.f32 %v213, %v298
  %v360 = vmul.f32 %v216, %v303
  %v361 = vmul.f32 %v221, %v308
  %v362 = vmul.f32 %v224, %v313
  %v363 = vmul.f32 %v229, %v318
  %v364 = vmul.f32 %v232, %v323
  %v365 = vmul.f32 %v237, %v328
  %v366 = vmul.f32 %v240, %v333
  %v367 = vmul.f32 %v245, %v338
  %v368 = vmul.f32 %v248, %v343
  %v369 = vmul.f32 %v253, %v348
  %v370 = vmul.f32 %v256, %v353
  %v371 = vld [vmem:[%s3] sm:$0x1]
  %v373 = vlaneseq
  %v374 = vshrl.u32 %v373, 7
  %v375 = vsub.s32 0, %v374
  %v376 = vrot.slane %v371, %v375
  %v378 = vadd.f32 %v355, %v376
  %v379 = vadd.f32 %v356, %v376
  %v380 = vadd.f32 %v357, %v376
  %v381 = vadd.f32 %v358, %v376
  %v382 = vadd.f32 %v359, %v376
  %v383 = vadd.f32 %v360, %v376
  %v384 = vadd.f32 %v361, %v376
  %v385 = vadd.f32 %v362, %v376
  %v386 = vadd.f32 %v363, %v376
  %v387 = vadd.f32 %v364, %v376
  %v388 = vadd.f32 %v365, %v376
  %v389 = vadd.f32 %v366, %v376
  %v390 = vadd.f32 %v367, %v376
  %v391 = vadd.f32 %v368, %v376
  %v392 = vadd.f32 %v369, %v376
  %v393 = vadd.f32 %v370, %v376
  %394 = vst [vmem:[%s4] sm:$0xff] %v378
  %395 = vst [vmem:[%s4 + $0x8] sm:$0xff] %v379
  %396 = vst [vmem:[%s4 + $0x10] sm:$0xff] %v380
  %397 = vst [vmem:[%s4 + $0x18] sm:$0xff] %v381
  %398 = vst [vmem:[%s4 + $0x20] sm:$0xff] %v382
  %399 = vst [vmem:[%s4 + $0x28] sm:$0xff] %v383
  %400 = vst [vmem:[%s4 + $0x30] sm:$0xff] %v384
  %401 = vst [vmem:[%s4 + $0x38] sm:$0xff] %v385
  %402 = vst [vmem:[%s4 + $0x40] sm:$0xff] %v386
  %403 = vst [vmem:[%s4 + $0x48] sm:$0xff] %v387
  %404 = vst [vmem:[%s4 + $0x50] sm:$0xff] %v388
  %405 = vst [vmem:[%s4 + $0x58] sm:$0xff] %v389
  %406 = vst [vmem:[%s4 + $0x60] sm:$0xff] %v390
  %407 = vst [vmem:[%s4 + $0x68] sm:$0xff] %v391
  %408 = vst [vmem:[%s4 + $0x70] sm:$0xff] %v392
  %409 = vst [vmem:[%s4 + $0x78] sm:$0xff] %v393
  // Predicated region
  $region18: #{linear_encoder_forward.1} parent=0 // pred_check
    _
  $region19: #{linear_encoder_forward.1} parent=0 // pred_check_branch
    %411 = sbr.rel (0) target = $region21
  $region20: #{linear_encoder_forward.1} parent=0 // pred_region
    _
  $region21: #{linear_encoder_forward.1} parent=0 // pred_fallthru
    _
  // Predicated region
  $region22: #{linear_encoder_forward.1} parent=0 // pred_check
    _
  $region23: #{linear_encoder_forward.1} parent=0 // pred_check_branch
    %413 = sbr.rel (0) target = $region25
  $region24: #{linear_encoder_forward.1} parent=0 // pred_region
    _
  $region25: #{linear_encoder_forward.1} parent=0 // pred_fallthru
    _

</llo_original>
